<compile_context>
chip_gen: v5e
topology: v5e:2x2
jax: 0.10.0
libtpu: 0.0.40
codegen_flags: <defaults>
</compile_context>

<pallas_src>
import jax
import jax.numpy as jnp
from jax.experimental import pallas as pl
from jax.experimental.pallas import tpu as pltpu


def _convT1x1_tanh_kernel(w_ref, x_ref, o_ref):
    # w_ref: (C_out, C_in)   -- full weight, resident across all grid steps
    # x_ref: (C_in, TM)      -- spatial tile of one batch element (batch dim squeezed)
    # o_ref: (C_out, TM)
    acc = jnp.dot(w_ref[...], x_ref[...], preferred_element_type=jnp.float32)
    # TODO(synk): on v7x, if the single EUP slot (tanh) becomes the bottleneck
    # once memory traffic is fixed, swap in a VPU polynomial tanh approximation.
    o_ref[...] = jnp.tanh(acc).astype(o_ref.dtype)


def conv_transpose3d_1x1_tanh(x, weight, *, tm_max=2048):
    """x: (N, C_in, D, H, W) float32; weight: (C_in, C_out, 1, 1, 1) float32."""
    N, C_in, D, H, W = x.shape
    C_out = weight.shape[1]
    DHW = D * H * W

    # (C_in, C_out) channel-mixing matrix; kernel wants (C_out, C_in) for W @ x.
    w_t = weight[:, :, 0, 0, 0].T            # (C_out, C_in)

    # Metadata-only reshape: NCDHW -> (N, C_in, DHW).  No transposes.
    x3 = x.reshape(N, C_in, DHW)

    # Tile choice: full spatial extent when it fits (single step per batch,
    # always a legal full-dim block), otherwise a 128-aligned 2048-wide tile.
    if DHW <= tm_max:
        tm = DHW
    else:
        tm = tm_max                          # multiple of 128; ragged last block OK

    grid = (N, pl.cdiv(DHW, tm))

    out3 = pl.pallas_call(
        _convT1x1_tanh_kernel,
        out_shape=jax.ShapeDtypeStruct((N, C_out, DHW), x.dtype),
        grid_spec=pltpu.PrefetchScalarGridSpec(
            num_scalar_prefetch=0,
            grid=grid,
            in_specs=[
                # Full weight, constant block index -> stays resident in VMEM.
                pl.BlockSpec((C_out, C_in), lambda n, j: (0, 0)),
                # One batch element (squeezed) x one spatial tile, lane-dense.
                pl.BlockSpec((None, C_in, tm), lambda n, j: (n, 0, j)),
            ],
            out_specs=pl.BlockSpec((None, C_out, tm), lambda n, j: (n, 0, j)),
        ),
        compiler_params=pltpu.CompilerParams(
            dimension_semantics=("parallel", "parallel"),
        ),
    )(w_t, x3)

    # Metadata-only reshape back: (N, C_out, DHW) -> (N, C_out, D, H, W).
    return out3.reshape(N, C_out, D, H, W)


if __name__ == "__main__":
    key = jax.random.PRNGKey(0)
    kx, kw = jax.random.split(key)

    # Small shapes consistent with the module: N=2, C=8, D=4, H=8, W=8.
    N, C, D, H, W = 2, 8, 4, 8, 8
    x = jax.random.normal(kx, (N, C, D, H, W), dtype=jnp.float32)

    # Deterministic ConvTranspose3d weight: (C_in, C_out, 1, 1, 1), no bias.
    bound = 1.0 / (C ** 0.5)
    weight = jax.random.uniform(
        kw, (C, C, 1, 1, 1), dtype=jnp.float32, minval=-bound, maxval=bound
    )

    out = conv_transpose3d_1x1_tanh(x, weight)
    out = jax.block_until_ready(out)

    # Reference check in plain JAX (same math as ConvTranspose3d 1x1x1 + tanh).
    ref = jnp.tanh(
        jnp.einsum("ncdhw,co->nodhw", x, weight[:, :, 0, 0, 0])
    )
    assert out.shape == (N, C, D, H, W)
    assert jnp.allclose(out, ref, atol=1e-5, rtol=1e-5)

    print("KERNEL_OK")
</pallas_src>

<mosaic_0001>
module attributes {stable_mosaic.version = 11 : i64} {
  func.func @_convT1x1_tanh_kernel(%arg0: i32, %arg1: i32, %arg2: memref<8x8xf32, #tpu.memory_space<vmem>>, %arg3: memref<1x8x256xf32, #tpu.memory_space<vmem>>, %arg4: memref<1x8x256xf32, #tpu.memory_space<vmem>>) attributes {dimension_semantics = [#tpu.dimension_semantics<parallel>, #tpu.dimension_semantics<parallel>], iteration_bounds = array<i64: 2, 1>, scalar_prefetch = 0 : i64, scratch_operands = 0 : i64, tpu.core_type = #tpu.core_type<tc>, window_params = [{pipeline_mode = #tpu.pipeline_mode<synchronous>, transform_indices = @transform_0, window_bounds = array<i64: 8, 8>}, {transform_indices = @transform_1, window_bounds = array<i64: 1, 8, 256>}, {transform_indices = @transform_2, window_bounds = array<i64: 1, 8, 256>}]} {
    %c0 = arith.constant 0 : index
    %c0_0 = arith.constant 0 : index
    %0 = vector.load %arg2[%c0, %c0_0] : memref<8x8xf32, #tpu.memory_space<vmem>>, vector<8x8xf32>
    %c0_1 = arith.constant 0 : index
    %c0_2 = arith.constant 0 : index
    %c0_3 = arith.constant 0 : index
    %1 = vector.load %arg3[%c0_1, %c0_2, %c0_3] : memref<1x8x256xf32, #tpu.memory_space<vmem>>, vector<1x8x256xf32>
    %2 = vector.shape_cast %1 : vector<1x8x256xf32> to vector<8x256xf32>
    %cst = arith.constant dense<0.000000e+00> : vector<8x256xf32>
    %3 = tpu.matmul %0, %2, %cst {dimension_numbers = #tpu.dot_dimension_numbers<[1], [0], [0], [1], [0, 0, 1, 1], [], []>} : vector<8x8xf32>, vector<8x256xf32>, vector<8x256xf32> -> vector<8x256xf32>
    %4 = math.tanh %3 : vector<8x256xf32>
    %c0_4 = arith.constant 0 : index
    %c0_5 = arith.constant 0 : index
    %c0_6 = arith.constant 0 : index
    %5 = vector.load %arg4[%c0_4, %c0_5, %c0_6] : memref<1x8x256xf32, #tpu.memory_space<vmem>>, vector<1x8x256xf32>
    %6 = vector.shape_cast %5 : vector<1x8x256xf32> to vector<8x256xf32>
    %7 = vector.shape_cast %4 : vector<8x256xf32> to vector<1x8x256xf32>
    tpu.vector_store %arg4[%c0_4, %c0_5, %c0_6], %7 {strides = array<i32>} : memref<1x8x256xf32, #tpu.memory_space<vmem>>, vector<1x8x256xf32>,
    return
  }
  func.func @transform_0(%arg0: i32, %arg1: i32) -> (i32, i32) {
    %c0_i32 = arith.constant 0 : i32
    %c0_i32_0 = arith.constant 0 : i32
    %c0_i32_1 = arith.constant 0 : i32
    return %c0_i32, %c0_i32_0 : i32, i32
  }
  func.func @transform_1(%arg0: i32, %arg1: i32) -> (i32, i32, i32) {
    %c0_i32 = arith.constant 0 : i32
    %c0_i32_0 = arith.constant 0 : i32
    return %arg0, %c0_i32, %arg1 : i32, i32, i32
  }
  func.func @transform_2(%arg0: i32, %arg1: i32) -> (i32, i32, i32) {
    %c0_i32 = arith.constant 0 : i32
    %c0_i32_0 = arith.constant 0 : i32
    return %arg0, %c0_i32, %arg1 : i32, i32, i32
  }
}

</mosaic_0001>

<llo_original>
// kernel: tpu_custom_call.1
$region0: #{tpu_custom_call.1}
  #allocation0 [shape = 'u32[]', space=smem, size = 0x4, offset = 0x4, fixed_abs, tag = 'smem constant byte address 0x4 - core index']
  #allocation1 [shape = 'u32[72,128]{1,0:T(1,128)}', space=vmem, size = 0x9000, scoped, tag = 'internal scratch']
  %s0 = inlined_call_operand.hbm [shape: f32[8,8], index: 0, kind: input, shape index: {}]
  %s1 = inlined_call_operand.hbm [shape: f32[2,8,256], index: 1, kind: input, shape index: {}]
  %s2 = inlined_call_operand.hbm [shape: f32[2,8,256], index: 2, kind: output, shape index: {}]
  %s3 = sld [smem:[#allocation0]]
  $region49: #{tpu_custom_call.1} parent=0
    _
  %s5 = ssub.s32 1, %s3
  %s6 = scalar_select 0, %s5, %s3
  $region1: #{tpu_custom_call.1} parent=0
    #allocation2 [shape = 'u8[4096]{0}', space=vmem, size = 0x1000, scoped, tag = 'input window, operand 0, single buffered']
    #allocation3 [shape = 's32[2]{0}', space=sflag, size = 0x8, scoped, tag = 'scoped memory for tpu_custom_call.1']
    #allocation4 [shape = 's32[2]{0}', space=sflag, size = 0x8, scoped, tag = 'scoped memory for tpu_custom_call.1']
    #allocation5 [shape = 'u8[16384]{0}', space=vmem, size = 0x4000, scoped, tag = 'input window, operand 1']
    #allocation6 [shape = 's32[2]{0}', space=sflag, size = 0x8, scoped, tag = 'scoped memory for tpu_custom_call.1']
    #allocation7 [shape = 'u8[16384]{0}', space=vmem, size = 0x4000, scoped, tag = 'output window, operand 0']
    %7 = vsyncpa [#allocation3], 0
    %8 = vsyncpa [#allocation6], 0
    %s9 = scalar_lea.sflag [#allocation6], 1
    %10 = vsyncpa %s9, 0
    %11 = vsyncpa [#allocation4], 0
    %s12 = scalar_lea.sflag [#allocation4], 1
    %13 = vsyncpa %s12, 0
    loop: start=0, step=1, limit=4
    $region2: #{tpu_custom_call.1} parent=1 // loop_pre_header
      _
    $region3: #{tpu_custom_call.1} parent=1 // loop_header
      %s15 = sphi 0, %s19
      %p16 = scmp.ge.s32.totalorder %s15, 4
      %s22 = sphi 0, %s34
      %s23 = sphi 0, %s30
      %s24 = sphi 0, %s22
      %s25 = sphi 0, %s23
      %s26 = sphi 0, %s24
      %s27 = sphi 0, %s25
      %s35 = sphi 0, %s35
      %s37 = sphi 0, %s35
      %s38 = sphi 0, %s37
      %s52 = sphi 0, %s38
      %s60 = sphi 0, %s62
      %s63 = sphi 0, %s60
      %s64 = sphi 0, %s63
      %s80 = sphi 0, %s64
      %s88 = sphi 0, %s90
      %s91 = sphi 0, %s88
      %s92 = sphi 0, %s91
      %s108 = sphi 0, %s92
    $region4: #{tpu_custom_call.1} parent=1 // loop_header_branch
      %18 = sbr.rel (%p16) target = $region8
    $region5: #{tpu_custom_call.1} parent=1 // loop_body
      %s20 = ssub.s32 %s15, 1
      %s21 = ssub.s32 %s15, 2
      %s28 = sadd.s32 1, %s23
      %p29 = scmp.ge.s32.totalorder %s28, 1
      %s30 = scalar_select %p29, 0, %s28
      %s31 = sadd.s32 1, %s22
      %s32 = scalar_select %p29, %s31, %s22
      %p33 = scmp.ge.s32.totalorder %s32, 2
      %s34 = scalar_select %p33, 0, %s32
      %s36 = sadd.s32 %s35, 1
      %p39 = scmp.eq.s32.totalorder %s15, 1
      %p40 = scmp.ne.s32.totalorder %s35, %s37
      %p41 = scmp.eq.s32.totalorder %s15, 0
      %p42 = por %p40, %p41
      %p43 = scmp.ne.s32.totalorder %s35, %s37
      %p44 = scmp.eq.s32.totalorder %s20, 1
      %p45 = por %p43, %p44
      %p46 = scmp.ne.s32.totalorder %s37, %s38
      %p47 = scmp.eq.s32.totalorder %s20, 0
      %p48 = por %p46, %p47
      %p49 = scmp.ne.s32.totalorder %s37, %s38
      %p50 = scmp.eq.s32.totalorder %s21, 1
      %p51 = por %p49, %p50
      %p53 = scmp.ne.s32.totalorder %s38, %s52
      %p54 = scmp.eq.s32.totalorder %s21, 0
      %p55 = por %p53, %p54
      %s56 = ssub.s32 %s22, %s34
      %s57 = ssub.s32 %s23, %s30
      %s58 = sor.u32 %s56, %s57
      %p59 = scmp.eq.s32.totalorder %s58, 0
      %s61 = sadd.s32 %s60, 1
      %s62 = scalar_select %p59, %s60, %s61
      %p65 = pneg %p59
      %p66 = scmp.eq.s32.totalorder %s15, 1
      %p67 = por %p65, %p66
      %p68 = scmp.ne.s32.totalorder %s60, %s63
      %p69 = scmp.eq.s32.totalorder %s15, 0
      %p70 = por %p68, %p69
      %p71 = scmp.ne.s32.totalorder %s60, %s63
      %p72 = scmp.eq.s32.totalorder %s20, 1
      %p73 = por %p71, %p72
      %p74 = scmp.ne.s32.totalorder %s63, %s64
      %p75 = scmp.eq.s32.totalorder %s20, 0
      %p76 = por %p74, %p75
      %p77 = scmp.ne.s32.totalorder %s63, %s64
      %p78 = scmp.eq.s32.totalorder %s21, 1
      %p79 = por %p77, %p78
      %p81 = scmp.ne.s32.totalorder %s64, %s80
      %p82 = scmp.eq.s32.totalorder %s21, 0
      %p83 = por %p81, %p82
      %s84 = ssub.s32 %s22, %s34
      %s85 = ssub.s32 %s23, %s30
      %s86 = sor.u32 %s84, %s85
      %p87 = scmp.eq.s32.totalorder %s86, 0
      %s89 = sadd.s32 %s88, 1
      %s90 = scalar_select %p87, %s88, %s89
      %p93 = pneg %p87
      %p94 = scmp.eq.s32.totalorder %s15, 1
      %p95 = por %p93, %p94
      %p96 = scmp.ne.s32.totalorder %s88, %s91
      %p97 = scmp.eq.s32.totalorder %s15, 0
      %p98 = por %p96, %p97
      %p99 = scmp.ne.s32.totalorder %s88, %s91
      %p100 = scmp.eq.s32.totalorder %s20, 1
      %p101 = por %p99, %p100
      %p102 = scmp.ne.s32.totalorder %s91, %s92
      %p103 = scmp.eq.s32.totalorder %s20, 0
      %p104 = por %p102, %p103
      %p105 = scmp.ne.s32.totalorder %s91, %s92
      %p106 = scmp.eq.s32.totalorder %s21, 1
      %p107 = por %p105, %p106
      %p109 = scmp.ne.s32.totalorder %s92, %s108
      %p110 = scmp.eq.s32.totalorder %s21, 0
      %p111 = por %p109, %p110
      %p112 = scmp.le.s32.totalorder 1, %s15
      %p113 = scmp.lt.s32.totalorder %s15, 3
      %p114 = pnand %p112, %p113
      %p115 = pneg %p114
      // Predicated region
      $region9: #{tpu_custom_call.1} parent=5 // pred_check
        _
      $region10: #{tpu_custom_call.1} parent=5 // pred_check_branch
        %117 = sbr.rel (%p114) target = $region12
      $region11: #{tpu_custom_call.1} parent=5 // pred_region
        %s118 = ssub.s32 %s15, 1
        // Predicated region
        $region13: #{tpu_custom_call.1} parent=11 // pred_check
          %p119 = pneg %p48
        $region14: #{tpu_custom_call.1} parent=11 // pred_check_branch
          %121 = sbr.rel (%p119) target = $region16
        $region15: #{tpu_custom_call.1} parent=11 // pred_region
          %123 = vsyncadd [#allocation3], 0
          %s125 = sshll.u32 %s0, 4
          %s126 = int_to_ptr.hbm [resolvable:$true] %s125
          %s127 = sshll.u32 [#allocation2], 4
          %s128 = int_to_ptr.vmem [resolvable:$true] %s127
          %130 = dma.hbm_to_vmem [thread:$0]  %s126, 128, %s128, [#allocation3]
        $region16: #{tpu_custom_call.1} parent=11 // pred_fallthru
          _
      $region12: #{tpu_custom_call.1} parent=5 // pred_fallthru
        _
      %p131 = scmp.lt.s32.totalorder %s15, 2
      // Predicated region
      $region17: #{tpu_custom_call.1} parent=5 // pred_check
        %p132 = pneg %p131
      $region18: #{tpu_custom_call.1} parent=5 // pred_check_branch
        %134 = sbr.rel (%p132) target = $region20
      $region19: #{tpu_custom_call.1} parent=5 // pred_region
        // Predicated region
        $region21: #{tpu_custom_call.1} parent=19 // pred_check
          %p135 = pneg %p70
        $region22: #{tpu_custom_call.1} parent=19 // pred_check_branch
          %137 = sbr.rel (%p135) target = $region24
        $region23: #{tpu_custom_call.1} parent=19 // pred_region
          %s138 = sand.u32 %s60, 1
          %s139 = scalar_lea.sflag [#allocation6], %s138
          %s140 = sand.u32 %s60, 1
          %s141 = smul.addr %s140, 16
          %s142 = scalar_lea.vmem [#allocation5], %s141
          %s143 = smul.u32 2, %s23
          %145 = vsyncadd %s139, 0
          %s146 = smul.addr %s22, 2
          %s147 = sadd.s32 %s143, %s146
          %s148 = smul.addr %s147, 8
          %s149 = scalar_lea.hbm %s1, %s148
          %s151 = sshll.u32 %s149, 4
          %s152 = int_to_ptr.hbm [resolvable:$true] %s151
          %s153 = sshll.u32 %s142, 4
          %s154 = int_to_ptr.vmem [resolvable:$true] %s153
          %156 = dma.hbm_to_vmem [thread:$0]  %s152, 256, %s154, %s139
        $region24: #{tpu_custom_call.1} parent=19 // pred_fallthru
          _
      $region20: #{tpu_custom_call.1} parent=5 // pred_fallthru
        _
      %p157 = scmp.le.s32.totalorder 1, %s15
      %p158 = scmp.lt.s32.totalorder %s15, 3
      %p159 = pnand %p157, %p158
      %p160 = pneg %p159
      // Predicated region
      $region25: #{tpu_custom_call.1} parent=5 // pred_check
        _
      $region26: #{tpu_custom_call.1} parent=5 // pred_check_branch
        %162 = sbr.rel (%p159) target = $region28
      $region27: #{tpu_custom_call.1} parent=5 // pred_region
        %s163 = ssub.s32 %s15, 1
        // Predicated region
        $region29: #{tpu_custom_call.1} parent=27 // pred_check
          %p164 = pneg %p48
        $region30: #{tpu_custom_call.1} parent=27 // pred_check_branch
          %166 = sbr.rel (%p164) target = $region32
        $region31: #{tpu_custom_call.1} parent=27 // pred_region
          %168 = dma.done [#allocation3], 128
        $region32: #{tpu_custom_call.1} parent=27 // pred_fallthru
          _
        %s169 = sand.u32 %s63, 1
        %s170 = scalar_lea.sflag [#allocation6], %s169
        %s171 = sand.u32 %s63, 1
        %s172 = smul.addr %s171, 16
        %s173 = scalar_lea.vmem [#allocation5], %s172
        // Predicated region
        $region33: #{tpu_custom_call.1} parent=27 // pred_check
          %p174 = pneg %p76
        $region34: #{tpu_custom_call.1} parent=27 // pred_check_branch
          %176 = sbr.rel (%p174) target = $region36
        $region35: #{tpu_custom_call.1} parent=27 // pred_region
          %178 = dma.done %s170, 256
        $region36: #{tpu_custom_call.1} parent=27 // pred_fallthru
          _
        %p179 = pneg %p48
        %p180 = pneg %p45
        %s181 = sand.u32 %s63, 1
        %s182 = scalar_lea.sflag [#allocation6], %s181
        %s183 = sand.u32 %s63, 1
        %s184 = smul.addr %s183, 16
        %s185 = scalar_lea.vmem [#allocation5], %s184
        %p186 = pneg %p76
        %p187 = pneg %p73
        %p188 = pneg %p104
        %p189 = pneg %p101
        %s190 = sand.u32 %s91, 1
        %s191 = scalar_lea.sflag [#allocation4], %s190
        %s192 = sand.u32 %s91, 1
        %s193 = smul.addr %s192, 16
        %s194 = scalar_lea.vmem [#allocation7], %s193
        %s195 = smul.u32 2, %s25
        %s196 = smul.u32 2, %s25
        %v197 = vld [vmem:[#allocation2] sm:$0xff]
        %v198 = vld [vmem:[%s173] sm:$0xff]
        %v199 = vld [vmem:[%s173 + $0x8] sm:$0xff]
        %vm200 = vcmask 64512
        %v202 = vsel %vm200, %v197, 0
        %204 = vmatpush.msra.mxu0 0.0
        %205 = vmatpush.msra.mxu0 0.0
        %206 = vmatpush.msra.mxu0 0.0
        %207 = vmatpush.msra.mxu0 0.0
        %208 = vmatpush.msra.mxu0 0.0
        %209 = vmatpush.msra.mxu0 0.0
        %210 = vmatpush.msra.mxu0 0.0
        %211 = vmatpush.msra.mxu0 0.0
        %212 = vmatpush.msra.mxu0 0.0
        %213 = vmatpush.msra.mxu0 0.0
        %214 = vmatpush.msra.mxu0 0.0
        %215 = vmatpush.msra.mxu0 0.0
        %216 = vmatpush.msra.mxu0 0.0
        %217 = vmatpush.msra.mxu0 0.0
        %218 = vmatpush.msra.mxu0 0.0
        %219 = vmatpush.msra.mxu0 %v198
        %220 = vmatmul.f32.gmra.mxu0 %v202
        %v221 = vpop.f32.mrf.mxu0
        %v222 = vadd.f32 0.0, %v221
        %223 = vdwg.mxu0
        %224 = vmatpush.msra.mxu0 0.0
        %225 = vmatpush.msra.mxu0 0.0
        %226 = vmatpush.msra.mxu0 0.0
        %227 = vmatpush.msra.mxu0 0.0
        %228 = vmatpush.msra.mxu0 0.0
        %229 = vmatpush.msra.mxu0 0.0
        %230 = vmatpush.msra.mxu0 0.0
        %231 = vmatpush.msra.mxu0 0.0
        %232 = vmatpush.msra.mxu0 0.0
        %233 = vmatpush.msra.mxu0 0.0
        %234 = vmatpush.msra.mxu0 0.0
        %235 = vmatpush.msra.mxu0 0.0
        %236 = vmatpush.msra.mxu0 0.0
        %237 = vmatpush.msra.mxu0 0.0
        %238 = vmatpush.msra.mxu0 0.0
        %239 = vmatpush.msra.mxu0 %v199
        %240 = vmatmul.f32.gmra.mxu0 %v202
        %v241 = vpop.f32.mrf.mxu0
        %v242 = vadd.f32 0.0, %v241
        %243 = vdwg.mxu0
        %v244 = vtanh.pop %v222
        %v245 = vtanh.pop %v242
        %246 = vst [vmem:[%s194] sm:$0xff] %v244
        %247 = vst [vmem:[%s194 + $0x8] sm:$0xff] %v245
        %s248 = sand.u32 %s91, 1
        %s249 = scalar_lea.sflag [#allocation4], %s248
        %s250 = sand.u32 %s91, 1
        %s251 = smul.addr %s250, 16
        %s252 = scalar_lea.vmem [#allocation7], %s251
        // Predicated region
        $region37: #{tpu_custom_call.1} parent=27 // pred_check
          %p253 = pneg %p101
        $region38: #{tpu_custom_call.1} parent=27 // pred_check_branch
          %255 = sbr.rel (%p253) target = $region40
        $region39: #{tpu_custom_call.1} parent=27 // pred_region
          %s256 = smul.u32 2, %s25
          %258 = vsyncadd %s249, 0
          %s259 = smul.addr %s24, 2
          %s260 = sadd.s32 %s256, %s259
          %s261 = smul.addr %s260, 8
          %s262 = scalar_lea.hbm %s2, %s261
          %s264 = sshll.u32 %s252, 4
          %s265 = int_to_ptr.vmem [resolvable:$true] %s264
          %s266 = sshll.u32 %s262, 4
          %s267 = int_to_ptr.hbm [resolvable:$true] %s266
          %269 = dma.vmem_to_hbm [thread:$0]  %s265, 256, %s267, %s249
        $region40: #{tpu_custom_call.1} parent=27 // pred_fallthru
          _
      $region28: #{tpu_custom_call.1} parent=5 // pred_fallthru
        _
      %p270 = scmp.le.s32.totalorder 2, %s15
      // Predicated region
      $region41: #{tpu_custom_call.1} parent=5 // pred_check
        %p271 = pneg %p270
      $region42: #{tpu_custom_call.1} parent=5 // pred_check_branch
        %273 = sbr.rel (%p271) target = $region44
      $region43: #{tpu_custom_call.1} parent=5 // pred_region
        %s274 = ssub.s32 %s15, 2
        // Predicated region
        $region45: #{tpu_custom_call.1} parent=43 // pred_check
          %p275 = pneg %p107
        $region46: #{tpu_custom_call.1} parent=43 // pred_check_branch
          %277 = sbr.rel (%p275) target = $region48
        $region47: #{tpu_custom_call.1} parent=43 // pred_region
          %s278 = sand.u32 %s92, 1
          %s279 = scalar_lea.sflag [#allocation4], %s278
          %s280 = sand.u32 %s92, 1
          %s281 = smul.addr %s280, 16
          %s282 = scalar_lea.vmem [#allocation7], %s281
          %284 = dma.done %s279, 256
        $region48: #{tpu_custom_call.1} parent=43 // pred_fallthru
          _
      $region44: #{tpu_custom_call.1} parent=5 // pred_fallthru
        _
    $region6: #{tpu_custom_call.1} parent=1 // loop_footer
      %s19 = sadd.s32 1, %s15
    $region7: #{tpu_custom_call.1} parent=1 // loop_footer_branch
      %14 = sbr.rel target = $region3
    $region8: #{tpu_custom_call.1} parent=1 // loop_exit
      _
    %285 = vsyncpa [#allocation3], 1
    %s286 = scalar_lea.sflag [#allocation3], 1
    %287 = vsyncpa %s286, 1
    %288 = vsyncpa [#allocation6], 1
    %s289 = scalar_lea.sflag [#allocation6], 1
    %290 = vsyncpa %s289, 1
    %291 = vsyncpa [#allocation4], 1
    %s292 = scalar_lea.sflag [#allocation4], 1
    %293 = vsyncpa %s292, 1

</llo_original>
